<compile_context>
chip_gen: v6e
topology: v6e:2x2x1
jax: 0.10.0
libtpu: 0.0.40
codegen_flags: <defaults>
</compile_context>

<pallas_src>
import jax
import jax.numpy as jnp
from jax.experimental import pallas as pl
from jax.experimental.pallas import tpu as pltpu


def _h_sigmoid_kernel(x_ref, o_ref):
    """y = clamp(x + 3, 0, 6) / 6 on one (rows, lanes) tile; f32 math in-register."""
    x = x_ref[...].astype(jnp.float32)
    y = jnp.minimum(jnp.maximum(x + 3.0, 0.0), 6.0) * (1.0 / 6.0)
    o_ref[...] = y.astype(o_ref.dtype)


def h_sigmoid(x):
    """h_sigmoid forward: ReLU6(x + 3) / 6 for floating-point inputs of any shape."""
    orig_shape = x.shape
    dtype = x.dtype
    n = x.size

    # Tiny inputs: pallas launch / layout plumbing dominates -> plain XLA elementwise.
    if n < 1024:
        y = jnp.minimum(jnp.maximum(x.astype(jnp.float32) + 3.0, 0.0), 6.0) * (1.0 / 6.0)
        return y.astype(dtype)

    itemsize = jnp.dtype(dtype).itemsize
    # Sublane packing of the storage dtype: 8 (f32), 16 (bf16/f16), 32 (int8/fp8).
    sub = 8 * max(1, 4 // itemsize)

    xf = x.reshape(-1)

    # Prefer a lane count (multiple of 128) that divides n exactly -> no pad/slice.
    lanes = None
    for cand in (1024, 512, 256, 128):
        if n % cand == 0:
            lanes = cand
            break

    padded = False
    if lanes is None:
        # Fallback: pad to a lane-dense rectangle; tail is sliced off afterwards.
        lanes = 512 if n >= sub * 512 else 128
        rows = pl.cdiv(n, lanes)
        xf = jnp.pad(xf, (0, rows * lanes - n))
        padded = True
    else:
        rows = n // lanes

    x2 = xf.reshape(rows, lanes)

    # Block sizing: <= ~3 MiB per block so 2 in + 2 out double buffers (~12 MiB)
    # fit every generation's scoped-VMEM default without flags.
    max_block_rows = max(sub, (3 * 1024 * 1024) // (lanes * itemsize))

    if rows <= max_block_rows:
        # Fits in one block.  Split in two (when sublane alignment allows) so the
        # "parallel" grid axis can shard across both v7x TensorCores.
        half_aligned = -(-(-(-rows // 2)) // sub) * sub  # ceil(ceil(rows/2)/sub)*sub
        if rows > 2 * sub and half_aligned < rows:
            block_rows = half_aligned
        else:
            block_rows = rows  # full-dim block (allowed regardless of sublane packing)
    else:
        block_rows = (max_block_rows // sub) * sub

    grid = (pl.cdiv(rows, block_rows),)  # partial last block is masked by Pallas

    out2 = pl.pallas_call(
        _h_sigmoid_kernel,
        out_shape=jax.ShapeDtypeStruct((rows, lanes), dtype),
        grid_spec=pltpu.PrefetchScalarGridSpec(
            num_scalar_prefetch=0,
            grid=grid,
            in_specs=[pl.BlockSpec((block_rows, lanes), lambda i: (i, 0))],
            out_specs=pl.BlockSpec((block_rows, lanes), lambda i: (i, 0)),
        ),
        compiler_params=pltpu.CompilerParams(
            dimension_semantics=("parallel",),
        ),
    )(x2)

    if padded:
        # Padded tail (h_sigmoid(0) = 0.5) is dropped here before the reshape.
        return out2.reshape(-1)[:n].reshape(orig_shape)
    return out2.reshape(orig_shape)


def h_sigmoid_ref(x):
    """Pure-JAX reference: ReLU6(x + 3) / 6 (same as the PyTorch forward)."""
    return jnp.clip(x + 3.0, 0.0, 6.0) / 6.0


if __name__ == "__main__":
    key = jax.random.PRNGKey(0)

    B, C, H, W = 2, 4, 16, 16
    # Scale so values span all ReLU6 regions (< -3, [-3, 3], > 3).
    x = 4.0 * jax.random.normal(key, (B, C, H, W), jnp.float32)

    out = h_sigmoid(x)
    out = jax.block_until_ready(out)

    ref = h_sigmoid_ref(x)
    assert out.shape == (B, C, H, W)
    assert out.dtype == x.dtype
    err = float(jnp.max(jnp.abs(out - ref)))
    assert jnp.allclose(out, ref, atol=1e-6, rtol=1e-6), err

    print("KERNEL_OK")
</pallas_src>

<mosaic_0001>
module attributes {stable_mosaic.version = 11 : i64} {
  func.func @_h_sigmoid_kernel(%arg0: i32, %arg1: memref<2x1024xf32, #tpu.memory_space<vmem>>, %arg2: memref<2x1024xf32, #tpu.memory_space<vmem>>) attributes {dimension_semantics = [#tpu.dimension_semantics<parallel>], iteration_bounds = array<i64: 1>, scalar_prefetch = 0 : i64, scratch_operands = 0 : i64, tpu.core_type = #tpu.core_type<tc>, window_params = [{transform_indices = @transform_0, window_bounds = array<i64: 2, 1024>}, {transform_indices = @transform_1, window_bounds = array<i64: 2, 1024>}]} {
    %c0 = arith.constant 0 : index
    %c0_0 = arith.constant 0 : index
    %0 = vector.load %arg1[%c0, %c0_0] : memref<2x1024xf32, #tpu.memory_space<vmem>>, vector<2x1024xf32>
    %cst = arith.constant 3.000000e+00 : f32
    %1 = vector.broadcast %cst : f32 to vector<2x1024xf32>
    %2 = arith.addf %0, %1 : vector<2x1024xf32>
    %cst_1 = arith.constant 0.000000e+00 : f32
    %3 = vector.broadcast %cst_1 : f32 to vector<2x1024xf32>
    %4 = arith.maximumf %2, %3 : vector<2x1024xf32>
    %cst_2 = arith.constant 6.000000e+00 : f32
    %5 = vector.broadcast %cst_2 : f32 to vector<2x1024xf32>
    %6 = arith.minimumf %4, %5 : vector<2x1024xf32>
    %cst_3 = arith.constant 0.166666672 : f32
    %7 = vector.broadcast %cst_3 : f32 to vector<2x1024xf32>
    %8 = arith.mulf %6, %7 : vector<2x1024xf32>
    %c0_4 = arith.constant 0 : index
    %c0_5 = arith.constant 0 : index
    %9 = vector.load %arg2[%c0_4, %c0_5] : memref<2x1024xf32, #tpu.memory_space<vmem>>, vector<2x1024xf32>
    tpu.vector_store %arg2[%c0_4, %c0_5], %8 {strides = array<i32>} : memref<2x1024xf32, #tpu.memory_space<vmem>>, vector<2x1024xf32>,
    return
  }
  func.func @transform_0(%arg0: i32) -> (i32, i32) {
    %c0_i32 = arith.constant 0 : i32
    %c0_i32_0 = arith.constant 0 : i32
    return %arg0, %c0_i32 : i32, i32
  }
  func.func @transform_1(%arg0: i32) -> (i32, i32) {
    %c0_i32 = arith.constant 0 : i32
    %c0_i32_0 = arith.constant 0 : i32
    return %arg0, %c0_i32 : i32, i32
  }
}

</mosaic_0001>

<llo_original>
// kernel: tpu_custom_call.1
$region0: #{tpu_custom_call.1}
  #allocation0 [shape = 'u32[]', space=smem, size = 0x4, offset = 0x4, fixed_abs, tag = 'smem constant byte address 0x4 - core index']
  #allocation1 [shape = 'u32[144,128]{1,0:T(1,128)}', space=vmem, size = 0x12000, scoped, tag = 'internal scratch']
  %s0 = inlined_call_operand.hbm [shape: f32[2,1024], index: 0, kind: input, shape index: {}]
  %s1 = inlined_call_operand.hbm [shape: f32[2,1024], index: 1, kind: output, shape index: {}]
  %s2 = sld [smem:[#allocation0]]
  $region18: #{tpu_custom_call.1} parent=0
    _
  %s4 = ssub.s32 1, %s2
  %s5 = scalar_select 0, %s4, %s2
  $region1: #{tpu_custom_call.1} parent=0
    #allocation2 [shape = 'u8[8192]{0}', space=vmem, size = 0x2000, scoped, tag = 'input window, operand 0, single buffered']
    #allocation3 [shape = 's32[1]{0}', space=sflag, size = 0x4, scoped, tag = 'scoped memory for tpu_custom_call.1']
    #allocation4 [shape = 's32[1]{0}', space=sflag, size = 0x4, scoped, tag = 'scoped memory for tpu_custom_call.1']
    #allocation5 [shape = 'u8[8192]{0}', space=vmem, size = 0x2000, scoped, tag = 'output window, operand 0, single buffered']
    %6 = vsyncpa [#allocation3], 0
    %7 = vsyncpa [#allocation4], 0
    // Predicated region
    $region2: #{tpu_custom_call.1} parent=1 // pred_check
      _
    $region3: #{tpu_custom_call.1} parent=1 // pred_check_branch
      %9 = sbr.rel (0) target = $region5
    $region4: #{tpu_custom_call.1} parent=1 // pred_region
      %s11 = ssub.s32 256, 256
      %12 = vsyncadd [#allocation3], %s11
      %s14 = sshll.u32 [#allocation2], 4
      %s15 = int_to_ptr.vmem [resolvable:$true] %s14
      %17 = dma.hbm_to_vmem [thread:$0]  %s0, 256, %s15, [#allocation3]
    $region5: #{tpu_custom_call.1} parent=1 // pred_fallthru
      _
    // Predicated region
    $region6: #{tpu_custom_call.1} parent=1 // pred_check
      _
    $region7: #{tpu_custom_call.1} parent=1 // pred_check_branch
      %19 = sbr.rel (0) target = $region9
    $region8: #{tpu_custom_call.1} parent=1 // pred_region
      %20 = dma.done [#allocation3], 256
    $region9: #{tpu_custom_call.1} parent=1 // pred_fallthru
      _
    %v21 = vld [vmem:[#allocation2] sm:$0xff]
    %v22 = vld [vmem:[#allocation2 + $0x8] sm:$0xff]
    %v23 = vadd.f32 %v21, 3.0
    %v24 = vadd.f32 %v22, 3.0
    %v25 = vmax.f32 %v23, 0.0
    %v26 = vmax.f32 %v24, 0.0
    %v27 = vmin.f32 %v25, 6.0
    %v28 = vmin.f32 %v26, 6.0
    %v29 = vmul.f32 %v27, 0.16666667
    %v30 = vmul.f32 %v28, 0.16666667
    %31 = vst [vmem:[#allocation5] sm:$0xff] %v29
    %32 = vst [vmem:[#allocation5 + $0x8] sm:$0xff] %v30
    // Predicated region
    $region10: #{tpu_custom_call.1} parent=1 // pred_check
      _
    $region11: #{tpu_custom_call.1} parent=1 // pred_check_branch
      %34 = sbr.rel (0) target = $region13
    $region12: #{tpu_custom_call.1} parent=1 // pred_region
      %s36 = ssub.s32 256, 256
      %37 = vsyncadd [#allocation4], %s36
      %s39 = sshll.u32 [#allocation5], 4
      %s40 = int_to_ptr.vmem [resolvable:$true] %s39
      %42 = dma.vmem_to_hbm [thread:$0]  %s40, 256, %s1, [#allocation4]
    $region13: #{tpu_custom_call.1} parent=1 // pred_fallthru
      _
    // Predicated region
    $region14: #{tpu_custom_call.1} parent=1 // pred_check
      _
    $region15: #{tpu_custom_call.1} parent=1 // pred_check_branch
      %44 = sbr.rel (0) target = $region17
    $region16: #{tpu_custom_call.1} parent=1 // pred_region
      %45 = dma.done [#allocation4], 256
    $region17: #{tpu_custom_call.1} parent=1 // pred_fallthru
      _
    %46 = vsyncpa [#allocation3], 1
    %47 = vsyncpa [#allocation4], 1

</llo_original>
